<compile_context>
chip_gen: v7x
topology: tpu7x:2x2x1
jax: 0.10.0
libtpu: 0.0.40
codegen_flags: <defaults>
</compile_context>

<pallas_src>
import numpy as np
import jax
import jax.numpy as jnp
from jax.experimental import pallas as pl
from jax.experimental.pallas import tpu as pltpu


# --------------------------------------------------------------------------
# Kernel
# --------------------------------------------------------------------------
def eq1to1_kernel(x_ref, w_id_ref, w_sum_ref, bias_ref, p_ref, pt_ref, o_ref):
    # x_ref   : (D, T)   lane-dense slab, T = nb*m columns (nb batch elements)
    # w_id_ref: (S, D)   identity-basis weights (x dtype)
    # w_sum_ref:(S, D)   sum-basis weights, f32, 1/m already folded in
    # bias_ref: (S, 1)   f32
    # p_ref   : (T, nb)  0/1 group indicator: column j belongs to group j // m
    # pt_ref  : (nb, T)  its transpose (f32)
    # o_ref   : (S, T)
    x = x_ref[...]                                                   # native dtype
    # identity basis: one block-wide GEMM on the MXU
    y = jnp.dot(w_id_ref[...], x, preferred_element_type=jnp.float32)      # (S, T)
    # sum basis: per-batch-element set sums via the 0/1 indicator matmul
    # (stays lane-dense, no relayout), tiny weight mix, broadcast back with P^T
    xg = jnp.dot(x, p_ref[...], preferred_element_type=jnp.float32)        # (D, nb)
    c = jnp.dot(w_sum_ref[...], xg, preferred_element_type=jnp.float32)
    c = c + bias_ref[...]                                                   # (S, nb)
    y = y + jnp.dot(c, pt_ref[...], preferred_element_type=jnp.float32)    # (S, T)
    o_ref[...] = y.astype(o_ref.dtype)


# --------------------------------------------------------------------------
# Tiling helpers (padding- and generation-aware)
# --------------------------------------------------------------------------
def _tpu_vmem_and_cores():
    """Physical VMEM per TensorCore and a 'looks like v7x (2 TCs)' hint."""
    vmem_cap = 64 * 1024 * 1024                 # conservative default (v7x per-TC)
    try:
        vmem_cap = int(pltpu.get_tpu_info().vmem_capacity_bytes)
    except Exception:
        pass
    # v7x: 64 MiB VMEM/TC and 2 TensorCores; v5e/v6e: 128 MiB and 1 TC.
    two_core = vmem_cap <= 80 * 1024 * 1024
    return vmem_cap, two_core


def _padded_tile_bytes(rows, cols, dtype):
    """VMEM footprint of a (rows, cols) tile with (8/16/32, 128) tile padding."""
    dt = jnp.dtype(dtype)
    sub = 8 * max(1, 4 // dt.itemsize)          # 8 (f32) / 16 (bf16) / 32 (int8)
    pr = -(-rows // sub) * sub
    pc = -(-cols // 128) * 128
    return pr * pc * dt.itemsize


def _choose_block_batch(N, D, S, m, dtype, *, vmem_cap, two_core,
                        target_tile_bytes=4 * 1024 * 1024):
    """Batch elements per grid step.

    Largest nb such that:
      * nb divides N and nb*m is a multiple of 128 (lane-dense, unmasked
        stores), or nb == N (full-array block, always legal);
      * double-buffered *padded* (x + out) tiles stay within ~40% of this
        generation's physical VMEM;
      * tiles stop growing once they reach ~4 MiB (grid-step overhead already
        amortised; HBM-bound beyond that);
      * on a 2-TensorCore part (v7x) at least 2 'parallel' grid steps are kept
        whenever a feasible smaller tile exists (megacore load balance).
    """
    cands = [nb for nb in range(1, N + 1)
             if N % nb == 0 and (nb == N or (nb * m) % 128 == 0)]
    budget = int(0.4 * vmem_cap)
    best = None
    for nb in cands:                                     # ascending
        T = nb * m
        xb = _padded_tile_bytes(D, T, dtype)
        ob = _padded_tile_bytes(S, T, dtype)
        over = 2 * (xb + ob) > budget
        steps = N // nb
        if best is not None and (over or (two_core and steps < 2)):
            break
        best = nb
        if over or max(xb, ob) >= target_tile_bytes:
            break
    return best


# --------------------------------------------------------------------------
# Wrapper
# --------------------------------------------------------------------------
def eq1to1_forward(x, coefs, bias, *, block_batch=None):
    """x: (N, D, m), coefs: (D, S, 2), bias: (1, S, 1) -> (N, S, m)."""
    N, D, m = x.shape
    S = coefs.shape[1]
    L = N * m
    xdt = x.dtype

    # Tiny host-side weight prep (f32), then cast the MXU LHS to x's dtype so a
    # bf16 x is fed to the MXU as bf16 (no in-kernel upcast).
    w_id = jnp.transpose(coefs[:, :, 0]).astype(jnp.float32).astype(xdt)          # (S, D)
    w_sum = (jnp.transpose(coefs[:, :, 1]) / jnp.float32(m)).astype(jnp.float32)  # (S, D)
    bias2 = jnp.reshape(bias, (S, 1)).astype(jnp.float32)

    vmem_cap, two_core = _tpu_vmem_and_cores()
    nb = block_batch if block_batch is not None else _choose_block_batch(
        N, D, S, m, xdt, vmem_cap=vmem_cap, two_core=two_core)
    assert N % nb == 0 and (nb == N or (nb * m) % 128 == 0), (nb, N, m)
    T = nb * m

    # 0/1 group-indicator matrices (constant, resident in VMEM).
    rows = np.arange(T) // m
    P = (rows[:, None] == np.arange(nb)[None, :])
    p = jnp.asarray(P, dtype=xdt)                       # (T, nb) matches x dtype
    pt = jnp.asarray(P.T, dtype=jnp.float32)            # (nb, T) f32 (mixed w/ f32 c)

    # Lane-dense layout plumbing (wrapper side): (N, D, m) -> (D, N*m).
    x_flat = jnp.reshape(jnp.transpose(x, (1, 0, 2)), (D, L))

    out_flat = pl.pallas_call(
        eq1to1_kernel,
        out_shape=jax.ShapeDtypeStruct((S, L), xdt),
        grid_spec=pltpu.PrefetchScalarGridSpec(
            num_scalar_prefetch=0,
            grid=(L // T,),
            in_specs=[
                pl.BlockSpec((D, T), lambda i: (0, i)),    # x slab
                pl.BlockSpec((S, D), lambda i: (0, 0)),    # resident weights
                pl.BlockSpec((S, D), lambda i: (0, 0)),
                pl.BlockSpec((S, 1), lambda i: (0, 0)),
                pl.BlockSpec((T, nb), lambda i: (0, 0)),   # group indicator
                pl.BlockSpec((nb, T), lambda i: (0, 0)),
            ],
            out_specs=pl.BlockSpec((S, T), lambda i: (0, i)),
        ),
        compiler_params=pltpu.CompilerParams(
            dimension_semantics=("parallel",),
            # ~96 MiB on v5e/v6e (128 MiB physical), ~48 MiB on v7x (64 MiB).
            vmem_limit_bytes=int(min(0.75 * vmem_cap, 96 * 1024 * 1024)),
        ),
    )(x_flat, w_id, w_sum, bias2, p, pt)

    # Back to the module's (N, S, m) layout.
    return jnp.transpose(jnp.reshape(out_flat, (S, N, m)), (1, 0, 2))


# --------------------------------------------------------------------------
# Pure-JAX reference (sanity check only)
# --------------------------------------------------------------------------
def _ops_1_to_1_ref(x):
    N, D, m = x.shape
    sum_all = jnp.sum(x, axis=-1, keepdims=True)               # (N, D, 1)
    op1 = x
    op2 = jnp.broadcast_to(sum_all, x.shape) / m
    return jnp.stack([op1, op2], axis=2)                       # (N, D, 2, m)


def _eq1to1_ref(x, coefs, bias):
    ops = _ops_1_to_1_ref(x)
    return jnp.einsum('dsb,ndbi->nsi', coefs, ops) + bias


if __name__ == "__main__":
    N, in_dim, out_dim, m = 32, 4, 6, 16
    basis_dim = 2

    key = jax.random.PRNGKey(0)
    kx, kc, kb = jax.random.split(key, 3)

    x = jax.random.normal(kx, (N, in_dim, m), dtype=jnp.float32)
    scale = np.sqrt(2.0 / (in_dim + out_dim + basis_dim))
    coefs = scale * jax.random.normal(kc, (in_dim, out_dim, basis_dim),
                                      dtype=jnp.float32)
    bias = 0.1 * jax.random.normal(kb, (1, out_dim, 1), dtype=jnp.float32)

    out = jax.block_until_ready(eq1to1_forward(x, coefs, bias))

    ref = _eq1to1_ref(x, coefs, bias)
    np.testing.assert_allclose(np.asarray(out), np.asarray(ref),
                               rtol=1e-5, atol=1e-5)
    assert out.shape == (N, out_dim, m)
    print("KERNEL_OK")
</pallas_src>

<mosaic_0001>
module attributes {stable_mosaic.version = 11 : i64} {
  func.func @eq1to1_kernel(%arg0: i32, %arg1: memref<4x256xf32, #tpu.memory_space<vmem>>, %arg2: memref<6x4xf32, #tpu.memory_space<vmem>>, %arg3: memref<6x4xf32, #tpu.memory_space<vmem>>, %arg4: memref<6x1xf32, #tpu.memory_space<vmem>>, %arg5: memref<256x16xf32, #tpu.memory_space<vmem>>, %arg6: memref<16x256xf32, #tpu.memory_space<vmem>>, %arg7: memref<6x256xf32, #tpu.memory_space<vmem>>) attributes {dimension_semantics = [#tpu.dimension_semantics<parallel>], iteration_bounds = array<i64: 2>, scalar_prefetch = 0 : i64, scratch_operands = 0 : i64, tpu.core_type = #tpu.core_type<tc>, window_params = [{transform_indices = @transform_0, window_bounds = array<i64: 4, 256>}, {pipeline_mode = #tpu.pipeline_mode<synchronous>, transform_indices = @transform_1, window_bounds = array<i64: 6, 4>}, {pipeline_mode = #tpu.pipeline_mode<synchronous>, transform_indices = @transform_2, window_bounds = array<i64: 6, 4>}, {pipeline_mode = #tpu.pipeline_mode<synchronous>, transform_indices = @transform_3, window_bounds = array<i64: 6, 1>}, {pipeline_mode = #tpu.pipeline_mode<synchronous>, transform_indices = @transform_4, window_bounds = array<i64: 256, 16>}, {pipeline_mode = #tpu.pipeline_mode<synchronous>, transform_indices = @transform_5, window_bounds = array<i64: 16, 256>}, {transform_indices = @transform_6, window_bounds = array<i64: 6, 256>}]} {
    %c0 = arith.constant 0 : index
    %c0_0 = arith.constant 0 : index
    %0 = vector.load %arg1[%c0, %c0_0] : memref<4x256xf32, #tpu.memory_space<vmem>>, vector<4x256xf32>
    %c0_1 = arith.constant 0 : index
    %c0_2 = arith.constant 0 : index
    %1 = vector.load %arg2[%c0_1, %c0_2] : memref<6x4xf32, #tpu.memory_space<vmem>>, vector<6x4xf32>
    %cst = arith.constant dense<0.000000e+00> : vector<6x256xf32>
    %2 = tpu.matmul %1, %0, %cst {dimension_numbers = #tpu.dot_dimension_numbers<[1], [0], [0], [1], [0, 0, 1, 1], [], []>} : vector<6x4xf32>, vector<4x256xf32>, vector<6x256xf32> -> vector<6x256xf32>
    %c0_3 = arith.constant 0 : index
    %c0_4 = arith.constant 0 : index
    %3 = vector.load %arg5[%c0_3, %c0_4] : memref<256x16xf32, #tpu.memory_space<vmem>>, vector<256x16xf32>
    %cst_5 = arith.constant dense<0.000000e+00> : vector<4x16xf32>
    %4 = tpu.matmul %0, %3, %cst_5 {dimension_numbers = #tpu.dot_dimension_numbers<[1], [0], [0], [1], [0, 0, 1, 1], [], []>} : vector<4x256xf32>, vector<256x16xf32>, vector<4x16xf32> -> vector<4x16xf32>
    %c0_6 = arith.constant 0 : index
    %c0_7 = arith.constant 0 : index
    %5 = vector.load %arg3[%c0_6, %c0_7] : memref<6x4xf32, #tpu.memory_space<vmem>>, vector<6x4xf32>
    %cst_8 = arith.constant dense<0.000000e+00> : vector<6x16xf32>
    %6 = tpu.matmul %5, %4, %cst_8 {dimension_numbers = #tpu.dot_dimension_numbers<[1], [0], [0], [1], [0, 0, 1, 1], [], []>} : vector<6x4xf32>, vector<4x16xf32>, vector<6x16xf32> -> vector<6x16xf32>
    %c0_9 = arith.constant 0 : index
    %c0_10 = arith.constant 0 : index
    %7 = vector.load %arg4[%c0_9, %c0_10] : memref<6x1xf32, #tpu.memory_space<vmem>>, vector<6x1xf32>
    %8 = vector.broadcast %7 : vector<6x1xf32> to vector<6x16xf32>
    %9 = arith.addf %6, %8 : vector<6x16xf32>
    %c0_11 = arith.constant 0 : index
    %c0_12 = arith.constant 0 : index
    %10 = vector.load %arg6[%c0_11, %c0_12] : memref<16x256xf32, #tpu.memory_space<vmem>>, vector<16x256xf32>
    %cst_13 = arith.constant dense<0.000000e+00> : vector<6x256xf32>
    %11 = tpu.matmul %9, %10, %cst_13 {dimension_numbers = #tpu.dot_dimension_numbers<[1], [0], [0], [1], [0, 0, 1, 1], [], []>} : vector<6x16xf32>, vector<16x256xf32>, vector<6x256xf32> -> vector<6x256xf32>
    %12 = arith.addf %2, %11 : vector<6x256xf32>
    %c0_14 = arith.constant 0 : index
    %c0_15 = arith.constant 0 : index
    %13 = vector.load %arg7[%c0_14, %c0_15] : memref<6x256xf32, #tpu.memory_space<vmem>>, vector<6x256xf32>
    tpu.vector_store %arg7[%c0_14, %c0_15], %12 {strides = array<i32>} : memref<6x256xf32, #tpu.memory_space<vmem>>, vector<6x256xf32>,
    return
  }
  func.func @transform_0(%arg0: i32) -> (i32, i32) {
    %c0_i32 = arith.constant 0 : i32
    %c0_i32_0 = arith.constant 0 : i32
    return %c0_i32, %arg0 : i32, i32
  }
  func.func @transform_1(%arg0: i32) -> (i32, i32) {
    %c0_i32 = arith.constant 0 : i32
    %c0_i32_0 = arith.constant 0 : i32
    %c0_i32_1 = arith.constant 0 : i32
    return %c0_i32, %c0_i32_0 : i32, i32
  }
  func.func @transform_2(%arg0: i32) -> (i32, i32) {
    %c0_i32 = arith.constant 0 : i32
    %c0_i32_0 = arith.constant 0 : i32
    %c0_i32_1 = arith.constant 0 : i32
    return %c0_i32, %c0_i32_0 : i32, i32
  }
  func.func @transform_3(%arg0: i32) -> (i32, i32) {
    %c0_i32 = arith.constant 0 : i32
    %c0_i32_0 = arith.constant 0 : i32
    %c0_i32_1 = arith.constant 0 : i32
    return %c0_i32, %c0_i32_0 : i32, i32
  }
  func.func @transform_4(%arg0: i32) -> (i32, i32) {
    %c0_i32 = arith.constant 0 : i32
    %c0_i32_0 = arith.constant 0 : i32
    %c0_i32_1 = arith.constant 0 : i32
    return %c0_i32, %c0_i32_0 : i32, i32
  }
  func.func @transform_5(%arg0: i32) -> (i32, i32) {
    %c0_i32 = arith.constant 0 : i32
    %c0_i32_0 = arith.constant 0 : i32
    %c0_i32_1 = arith.constant 0 : i32
    return %c0_i32, %c0_i32_0 : i32, i32
  }
  func.func @transform_6(%arg0: i32) -> (i32, i32) {
    %c0_i32 = arith.constant 0 : i32
    %c0_i32_0 = arith.constant 0 : i32
    return %c0_i32, %arg0 : i32, i32
  }
}

</mosaic_0001>

<llo_original>
// kernel: tpu_custom_call.1
$region0: #{tpu_custom_call.1}
  #allocation0 [shape = 'u32[]', space=smem, size = 0x4, offset = 0x4, fixed_abs, tag = 'smem constant byte address 0x4 - core index']
  #allocation1 [shape = 'u32[144,128]{1,0:T(1,128)}', space=vmem, size = 0x12000, scoped, tag = 'internal scratch']
  %s0 = inlined_call_operand.vmem [shape: f32[4,512], index: 0, kind: input, shape index: {}]
  %s1 = inlined_call_operand.vmem [shape: f32[6,4], index: 1, kind: input, shape index: {}]
  %s2 = inlined_call_operand.vmem [shape: f32[6,4], index: 2, kind: input, shape index: {}]
  %s3 = inlined_call_operand.vmem [shape: f32[6,1], index: 3, kind: input, shape index: {}]
  %s4 = inlined_call_operand.vmem [shape: f32[256,16], index: 4, kind: input, shape index: {}]
  %s5 = inlined_call_operand.vmem [shape: f32[16,256], index: 5, kind: input, shape index: {}]
  %s6 = inlined_call_operand.hbm [shape: f32[6,512], index: 6, kind: output, shape index: {}]
  %s7 = sld [smem:[#allocation0]]
  $region57: #{tpu_custom_call.1} parent=0
    _
  %s9 = ssub.s32 1, %s7
  %s10 = scalar_select 0, %s9, %s7
  $region1: #{tpu_custom_call.1} parent=0
    #allocation2 [shape = 'u8[16384]{0}', space=vmem, size = 0x4000, scoped, tag = 'output window, operand 0']
    #allocation3 [shape = 's32[2]{0}', space=sflag, size = 0x8, scoped, tag = 'scoped memory for tpu_custom_call.1']
    %11 = vsyncpa [#allocation3], 0
    %s12 = scalar_lea.sflag [#allocation3], 1
    %13 = vsyncpa %s12, 0
    loop: start=0, step=1, limit=4
    $region2: #{tpu_custom_call.1} parent=1 // loop_pre_header
      _
    $region3: #{tpu_custom_call.1} parent=1 // loop_header
      %s15 = sphi 0, %s19
      %p16 = scmp.ge.s32.totalorder %s15, 4
      %s25 = sphi 0, %s27
      %s28 = sphi 0, %s25
      %s29 = sphi 0, %s28
      %s45 = sphi 0, %s29
      %s49 = sphi 0, %s49
      %s51 = sphi 0, %s49
      %s52 = sphi 0, %s51
      %s66 = sphi 0, %s52
      %s70 = sphi 0, %s70
      %s72 = sphi 0, %s70
      %s73 = sphi 0, %s72
      %s87 = sphi 0, %s73
      %s91 = sphi 0, %s91
      %s93 = sphi 0, %s91
      %s94 = sphi 0, %s93
      %s108 = sphi 0, %s94
      %s112 = sphi 0, %s112
      %s114 = sphi 0, %s112
      %s115 = sphi 0, %s114
      %s129 = sphi 0, %s115
      %s133 = sphi 0, %s133
      %s135 = sphi 0, %s133
      %s136 = sphi 0, %s135
      %s150 = sphi 0, %s136
      %s156 = sphi 0, %s158
      %s159 = sphi 0, %s156
      %s160 = sphi 0, %s159
      %s176 = sphi 0, %s160
    $region4: #{tpu_custom_call.1} parent=1 // loop_header_branch
      %18 = sbr.rel (%p16) target = $region8
    $region5: #{tpu_custom_call.1} parent=1 // loop_body
      %s20 = ssub.s32 %s15, 1
      %s21 = ssub.s32 %s15, 2
      %s22 = sadd.s32 %s15, 1
      %s23 = ssub.s32 %s15, %s22
      %p24 = scmp.eq.s32.totalorder %s23, 0
      %s26 = sadd.s32 %s25, 1
      %s27 = scalar_select %p24, %s25, %s26
      %p30 = pneg %p24
      %p31 = scmp.eq.s32.totalorder %s15, 1
      %p32 = por %p30, %p31
      %p33 = scmp.ne.s32.totalorder %s25, %s28
      %p34 = scmp.eq.s32.totalorder %s15, 0
      %p35 = por %p33, %p34
      %p36 = scmp.ne.s32.totalorder %s25, %s28
      %p37 = scmp.eq.s32.totalorder %s20, 1
      %p38 = por %p36, %p37
      %p39 = scmp.ne.s32.totalorder %s28, %s29
      %p40 = scmp.eq.s32.totalorder %s20, 0
      %p41 = por %p39, %p40
      %p42 = scmp.ne.s32.totalorder %s28, %s29
      %p43 = scmp.eq.s32.totalorder %s21, 1
      %p44 = por %p42, %p43
      %p46 = scmp.ne.s32.totalorder %s29, %s45
      %p47 = scmp.eq.s32.totalorder %s21, 0
      %p48 = por %p46, %p47
      %s50 = sadd.s32 %s49, 1
      %p53 = scmp.eq.s32.totalorder %s15, 1
      %p54 = scmp.ne.s32.totalorder %s49, %s51
      %p55 = scmp.eq.s32.totalorder %s15, 0
      %p56 = por %p54, %p55
      %p57 = scmp.ne.s32.totalorder %s49, %s51
      %p58 = scmp.eq.s32.totalorder %s20, 1
      %p59 = por %p57, %p58
      %p60 = scmp.ne.s32.totalorder %s51, %s52
      %p61 = scmp.eq.s32.totalorder %s20, 0
      %p62 = por %p60, %p61
      %p63 = scmp.ne.s32.totalorder %s51, %s52
      %p64 = scmp.eq.s32.totalorder %s21, 1
      %p65 = por %p63, %p64
      %p67 = scmp.ne.s32.totalorder %s52, %s66
      %p68 = scmp.eq.s32.totalorder %s21, 0
      %p69 = por %p67, %p68
      %s71 = sadd.s32 %s70, 1
      %p74 = scmp.eq.s32.totalorder %s15, 1
      %p75 = scmp.ne.s32.totalorder %s70, %s72
      %p76 = scmp.eq.s32.totalorder %s15, 0
      %p77 = por %p75, %p76
      %p78 = scmp.ne.s32.totalorder %s70, %s72
      %p79 = scmp.eq.s32.totalorder %s20, 1
      %p80 = por %p78, %p79
      %p81 = scmp.ne.s32.totalorder %s72, %s73
      %p82 = scmp.eq.s32.totalorder %s20, 0
      %p83 = por %p81, %p82
      %p84 = scmp.ne.s32.totalorder %s72, %s73
      %p85 = scmp.eq.s32.totalorder %s21, 1
      %p86 = por %p84, %p85
      %p88 = scmp.ne.s32.totalorder %s73, %s87
      %p89 = scmp.eq.s32.totalorder %s21, 0
      %p90 = por %p88, %p89
      %s92 = sadd.s32 %s91, 1
      %p95 = scmp.eq.s32.totalorder %s15, 1
      %p96 = scmp.ne.s32.totalorder %s91, %s93
      %p97 = scmp.eq.s32.totalorder %s15, 0
      %p98 = por %p96, %p97
      %p99 = scmp.ne.s32.totalorder %s91, %s93
      %p100 = scmp.eq.s32.totalorder %s20, 1
      %p101 = por %p99, %p100
      %p102 = scmp.ne.s32.totalorder %s93, %s94
      %p103 = scmp.eq.s32.totalorder %s20, 0
      %p104 = por %p102, %p103
      %p105 = scmp.ne.s32.totalorder %s93, %s94
      %p106 = scmp.eq.s32.totalorder %s21, 1
      %p107 = por %p105, %p106
      %p109 = scmp.ne.s32.totalorder %s94, %s108
      %p110 = scmp.eq.s32.totalorder %s21, 0
      %p111 = por %p109, %p110
      %s113 = sadd.s32 %s112, 1
      %p116 = scmp.eq.s32.totalorder %s15, 1
      %p117 = scmp.ne.s32.totalorder %s112, %s114
      %p118 = scmp.eq.s32.totalorder %s15, 0
      %p119 = por %p117, %p118
      %p120 = scmp.ne.s32.totalorder %s112, %s114
      %p121 = scmp.eq.s32.totalorder %s20, 1
      %p122 = por %p120, %p121
      %p123 = scmp.ne.s32.totalorder %s114, %s115
      %p124 = scmp.eq.s32.totalorder %s20, 0
      %p125 = por %p123, %p124
      %p126 = scmp.ne.s32.totalorder %s114, %s115
      %p127 = scmp.eq.s32.totalorder %s21, 1
      %p128 = por %p126, %p127
      %p130 = scmp.ne.s32.totalorder %s115, %s129
      %p131 = scmp.eq.s32.totalorder %s21, 0
      %p132 = por %p130, %p131
      %s134 = sadd.s32 %s133, 1
      %p137 = scmp.eq.s32.totalorder %s15, 1
      %p138 = scmp.ne.s32.totalorder %s133, %s135
      %p139 = scmp.eq.s32.totalorder %s15, 0
      %p140 = por %p138, %p139
      %p141 = scmp.ne.s32.totalorder %s133, %s135
      %p142 = scmp.eq.s32.totalorder %s20, 1
      %p143 = por %p141, %p142
      %p144 = scmp.ne.s32.totalorder %s135, %s136
      %p145 = scmp.eq.s32.totalorder %s20, 0
      %p146 = por %p144, %p145
      %p147 = scmp.ne.s32.totalorder %s135, %s136
      %p148 = scmp.eq.s32.totalorder %s21, 1
      %p149 = por %p147, %p148
      %p151 = scmp.ne.s32.totalorder %s136, %s150
      %p152 = scmp.eq.s32.totalorder %s21, 0
      %p153 = por %p151, %p152
      %s154 = ssub.s32 %s15, %s22
      %p155 = scmp.eq.s32.totalorder %s154, 0
      %s157 = sadd.s32 %s156, 1
      %s158 = scalar_select %p155, %s156, %s157
      %p161 = pneg %p155
      %p162 = scmp.eq.s32.totalorder %s15, 1
      %p163 = por %p161, %p162
      %p164 = scmp.ne.s32.totalorder %s156, %s159
      %p165 = scmp.eq.s32.totalorder %s15, 0
      %p166 = por %p164, %p165
      %p167 = scmp.ne.s32.totalorder %s156, %s159
      %p168 = scmp.eq.s32.totalorder %s20, 1
      %p169 = por %p167, %p168
      %p170 = scmp.ne.s32.totalorder %s159, %s160
      %p171 = scmp.eq.s32.totalorder %s20, 0
      %p172 = por %p170, %p171
      %p173 = scmp.ne.s32.totalorder %s159, %s160
      %p174 = scmp.eq.s32.totalorder %s21, 1
      %p175 = por %p173, %p174
      %p177 = scmp.ne.s32.totalorder %s160, %s176
      %p178 = scmp.eq.s32.totalorder %s21, 0
      %p179 = por %p177, %p178
      %p180 = scmp.le.s32.totalorder 1, %s15
      %p181 = scmp.lt.s32.totalorder %s15, 3
      %p182 = pnand %p180, %p181
      %p183 = pneg %p182
      // Predicated region
      $region9: #{tpu_custom_call.1} parent=5 // pred_check
        _
      $region10: #{tpu_custom_call.1} parent=5 // pred_check_branch
        %185 = sbr.rel (%p182) target = $region12
      $region11: #{tpu_custom_call.1} parent=5 // pred_region
        %s186 = ssub.s32 %s15, 1
        // Predicated region
        $region13: #{tpu_custom_call.1} parent=11 // pred_check
          %p187 = pneg %p62
        $region14: #{tpu_custom_call.1} parent=11 // pred_check_branch
          %189 = sbr.rel (%p187) target = $region16
        $region15: #{tpu_custom_call.1} parent=11 // pred_region
          _
        $region16: #{tpu_custom_call.1} parent=11 // pred_fallthru
          _
        // Predicated region
        $region17: #{tpu_custom_call.1} parent=11 // pred_check
          %p190 = pneg %p83
        $region18: #{tpu_custom_call.1} parent=11 // pred_check_branch
          %192 = sbr.rel (%p190) target = $region20
        $region19: #{tpu_custom_call.1} parent=11 // pred_region
          _
        $region20: #{tpu_custom_call.1} parent=11 // pred_fallthru
          _
        // Predicated region
        $region21: #{tpu_custom_call.1} parent=11 // pred_check
          %p193 = pneg %p104
        $region22: #{tpu_custom_call.1} parent=11 // pred_check_branch
          %195 = sbr.rel (%p193) target = $region24
        $region23: #{tpu_custom_call.1} parent=11 // pred_region
          _
        $region24: #{tpu_custom_call.1} parent=11 // pred_fallthru
          _
        // Predicated region
        $region25: #{tpu_custom_call.1} parent=11 // pred_check
          %p196 = pneg %p125
        $region26: #{tpu_custom_call.1} parent=11 // pred_check_branch
          %198 = sbr.rel (%p196) target = $region28
        $region27: #{tpu_custom_call.1} parent=11 // pred_region
          _
        $region28: #{tpu_custom_call.1} parent=11 // pred_fallthru
          _
        // Predicated region
        $region29: #{tpu_custom_call.1} parent=11 // pred_check
          %p199 = pneg %p146
        $region30: #{tpu_custom_call.1} parent=11 // pred_check_branch
          %201 = sbr.rel (%p199) target = $region32
        $region31: #{tpu_custom_call.1} parent=11 // pred_region
          _
        $region32: #{tpu_custom_call.1} parent=11 // pred_fallthru
          _
      $region12: #{tpu_custom_call.1} parent=5 // pred_fallthru
        _
      %p202 = scmp.lt.s32.totalorder %s15, 2
      // Predicated region
      $region33: #{tpu_custom_call.1} parent=5 // pred_check
        %p203 = pneg %p202
      $region34: #{tpu_custom_call.1} parent=5 // pred_check_branch
        %205 = sbr.rel (%p203) target = $region36
      $region35: #{tpu_custom_call.1} parent=5 // pred_region
        // Predicated region
        $region37: #{tpu_custom_call.1} parent=35 // pred_check
          %p206 = pneg %p35
        $region38: #{tpu_custom_call.1} parent=35 // pred_check_branch
          %208 = sbr.rel (%p206) target = $region40
        $region39: #{tpu_custom_call.1} parent=35 // pred_region
          %s209 = smul.u32 2, %s15
          %p210 = scmp.lt.s32.totalorder %s209, 3
          %s211 = scalar_select %p210, %s209, 3
          %s212 = smul.addr %s211, 4
          %s213 = scalar_lea.vmem %s0, %s212
          %s214 = smul.u32 2, %s15
        $region40: #{tpu_custom_call.1} parent=35 // pred_fallthru
          _
      $region36: #{tpu_custom_call.1} parent=5 // pred_fallthru
        _
      %p215 = scmp.le.s32.totalorder 1, %s15
      %p216 = scmp.lt.s32.totalorder %s15, 3
      %p217 = pnand %p215, %p216
      %p218 = pneg %p217
      // Predicated region
      $region41: #{tpu_custom_call.1} parent=5 // pred_check
        _
      $region42: #{tpu_custom_call.1} parent=5 // pred_check_branch
        %220 = sbr.rel (%p217) target = $region44
      $region43: #{tpu_custom_call.1} parent=5 // pred_region
        %s221 = ssub.s32 %s15, 1
        %s222 = smul.u32 2, %s20
        %p223 = scmp.lt.s32.totalorder %s222, 3
        %s224 = scalar_select %p223, %s222, 3
        %s225 = smul.addr %s224, 4
        %s226 = scalar_lea.vmem %s0, %s225
        %p227 = pneg %p41
        %p228 = pneg %p38
        %p229 = pneg %p62
        %p230 = pneg %p59
        %p231 = pneg %p83
        %p232 = pneg %p80
        %p233 = pneg %p104
        %p234 = pneg %p101
        %p235 = pneg %p125
        %p236 = pneg %p122
        %p237 = pneg %p146
        %p238 = pneg %p143
        %p239 = pneg %p172
        %p240 = pneg %p169
        %s241 = sand.u32 %s159, 1
        %s242 = scalar_lea.sflag [#allocation3], %s241
        %s243 = sand.u32 %s159, 1
        %s244 = smul.addr %s243, 16
        %s245 = scalar_lea.vmem [#allocation2], %s244
        %s246 = smul.u32 2, %s20
        %p247 = scmp.lt.s32.totalorder %s246, 3
        %s248 = scalar_select %p247, %s246, 3
        %s249 = smul.addr %s248, 4
        %s250 = scalar_lea.vmem %s0, %s249
        %s251 = smul.u32 2, %s20
        %s252 = smul.u32 2, %s20
        %v253 = vld [vmem:[%s250] sm:$0xff]
        %v254 = vld [vmem:[%s1] sm:$0x3f]
        %v255 = vld [vmem:[%s4] sm:$0xff]
        %v256 = vld [vmem:[%s4 + $0x8] sm:$0xff]
        %v257 = vld [vmem:[%s4 + $0x10] sm:$0xff]
        %v258 = vld [vmem:[%s4 + $0x18] sm:$0xff]
        %v259 = vld [vmem:[%s4 + $0x20] sm:$0xff]
        %v260 = vld [vmem:[%s4 + $0x28] sm:$0xff]
        %v261 = vld [vmem:[%s4 + $0x30] sm:$0xff]
        %v262 = vld [vmem:[%s4 + $0x38] sm:$0xff]
        %v263 = vld [vmem:[%s4 + $0x40] sm:$0xff]
        %v264 = vld [vmem:[%s4 + $0x48] sm:$0xff]
        %v265 = vld [vmem:[%s4 + $0x50] sm:$0xff]
        %v266 = vld [vmem:[%s4 + $0x58] sm:$0xff]
        %v267 = vld [vmem:[%s4 + $0x60] sm:$0xff]
        %v268 = vld [vmem:[%s4 + $0x68] sm:$0xff]
        %v269 = vld [vmem:[%s4 + $0x70] sm:$0xff]
        %v270 = vld [vmem:[%s4 + $0x78] sm:$0xff]
        %v271 = vld [vmem:[%s4 + $0x80] sm:$0xff]
        %v272 = vld [vmem:[%s4 + $0x88] sm:$0xff]
        %v273 = vld [vmem:[%s4 + $0x90] sm:$0xff]
        %v274 = vld [vmem:[%s4 + $0x98] sm:$0xff]
        %v275 = vld [vmem:[%s4 + $0xa0] sm:$0xff]
        %v276 = vld [vmem:[%s4 + $0xa8] sm:$0xff]
        %v277 = vld [vmem:[%s4 + $0xb0] sm:$0xff]
        %v278 = vld [vmem:[%s4 + $0xb8] sm:$0xff]
        %v279 = vld [vmem:[%s4 + $0xc0] sm:$0xff]
        %v280 = vld [vmem:[%s4 + $0xc8] sm:$0xff]
        %v281 = vld [vmem:[%s4 + $0xd0] sm:$0xff]
        %v282 = vld [vmem:[%s4 + $0xd8] sm:$0xff]
        %v283 = vld [vmem:[%s4 + $0xe0] sm:$0xff]
        %v284 = vld [vmem:[%s4 + $0xe8] sm:$0xff]
        %v285 = vld [vmem:[%s4 + $0xf0] sm:$0xff]
        %v286 = vld [vmem:[%s4 + $0xf8] sm:$0xff]
        %v288 = vcombine.high %v253, %v253
        %290 = vmatprep.subr.mxu0 0.0
        %291 = vmatpush1.msra.mxu0 %v255
        %292 = vmatprep.subr.mxu0 0.0
        %293 = vmatpush1.msra.mxu0 %v256
        %294 = vmatprep.subr.mxu0 0.0
        %295 = vmatpush1.msra.mxu0 %v257
        %296 = vmatprep.subr.mxu0 0.0
        %297 = vmatpush1.msra.mxu0 %v258
        %298 = vmatprep.subr.mxu0 0.0
        %299 = vmatpush1.msra.mxu0 %v259
        %300 = vmatprep.subr.mxu0 0.0
        %301 = vmatpush1.msra.mxu0 %v260
        %302 = vmatprep.subr.mxu0 0.0
        %303 = vmatpush1.msra.mxu0 %v261
        %304 = vmatprep.subr.mxu0 0.0
        %305 = vmatpush1.msra.mxu0 %v262
        %306 = vmatprep.subr.mxu0 0.0
        %307 = vmatpush1.msra.mxu0 %v263
        %308 = vmatprep.subr.mxu0 0.0
        %309 = vmatpush1.msra.mxu0 %v264
        %310 = vmatprep.subr.mxu0 0.0
        %311 = vmatpush1.msra.mxu0 %v265
        %312 = vmatprep.subr.mxu0 0.0
        %313 = vmatpush1.msra.mxu0 %v266
        %314 = vmatprep.subr.mxu0 0.0
        %315 = vmatpush1.msra.mxu0 %v267
        %316 = vmatprep.subr.mxu0 0.0
        %317 = vmatpush1.msra.mxu0 %v268
        %318 = vmatprep.subr.mxu0 0.0
        %319 = vmatpush1.msra.mxu0 %v269
        %320 = vmatprep.subr.mxu0 0.0
        %321 = vmatpush1.msra.mxu0 %v270
        %322 = vmatprep.subr.mxu0 0.0
        %323 = vmatpush1.msra.mxu0 %v271
        %324 = vmatprep.subr.mxu0 0.0
        %325 = vmatpush1.msra.mxu0 %v272
        %326 = vmatprep.subr.mxu0 0.0
        %327 = vmatpush1.msra.mxu0 %v273
        %328 = vmatprep.subr.mxu0 0.0
        %329 = vmatpush1.msra.mxu0 %v274
        %330 = vmatprep.subr.mxu0 0.0
        %331 = vmatpush1.msra.mxu0 %v275
        %332 = vmatprep.subr.mxu0 0.0
        %333 = vmatpush1.msra.mxu0 %v276
        %334 = vmatprep.subr.mxu0 0.0
        %335 = vmatpush1.msra.mxu0 %v277
        %336 = vmatprep.subr.mxu0 0.0
        %337 = vmatpush1.msra.mxu0 %v278
        %338 = vmatprep.subr.mxu0 0.0
        %339 = vmatpush1.msra.mxu0 %v279
        %340 = vmatprep.subr.mxu0 0.0
        %341 = vmatpush1.msra.mxu0 %v280
        %342 = vmatprep.subr.mxu0 0.0
        %343 = vmatpush1.msra.mxu0 %v281
        %344 = vmatprep.subr.mxu0 0.0
        %345 = vmatpush1.msra.mxu0 %v282
        %346 = vmatprep.subr.mxu0 0.0
        %347 = vmatpush1.msra.mxu0 %v283
        %348 = vmatprep.subr.mxu0 0.0
        %349 = vmatpush1.msra.mxu0 %v284
        %350 = vmatprep.subr.mxu0 0.0
        %351 = vmatpush1.msra.mxu0 %v285
        %352 = vmatprep.subr.mxu0 0.0
        %353 = vmatpush1.msra.mxu0 %v286
        %354 = vmatprep.mubr.f32.mxu0 %v288
        %355 = vmatmul.mubr.f32.gmra.mrb[0].mxu0 %v253
        %v356 = vpop.f32.mrb[0].mxu0
        %v357 = vadd.f32 0.0, %v356
        %v358 = vpop.f32.mrb[0].mxu0
        %359 = vdwg.mxu0
        %v360 = vld [vmem:[%s2] sm:$0x3f]
        %v361 = vld [vmem:[%s3] sm:$0x3f]
        %363 = vset.pattern.permute.xlu0 0
        %364 = vperm.xlu0 %363, %v361
        %v365 = vpop.permute.xlu0 %364
        %vm367 = vcmask 31744
        %v369 = vsel %vm367, %v360, 0
        %vm371 = vcmask 1043456
        %v373 = vsel %vm371, %v357, 0
        %375 = vmatprep.subr.mxu0 0.0
        %376 = vmatpush1.msra.mxu0 %v373
        %377 = vmatprep.subr.mxu0 0.0
        %378 = vmatpush1.msra.mxu0 0.0
        %379 = vmatprep.subr.mxu0 0.0
        %380 = vmatpush1.msra.mxu0 0.0
        %381 = vmatprep.subr.mxu0 0.0
        %382 = vmatpush1.msra.mxu0 0.0
        %383 = vmatprep.subr.mxu0 0.0
        %384 = vmatpush1.msra.mxu0 0.0
        %385 = vmatprep.subr.mxu0 0.0
        %386 = vmatpush1.msra.mxu0 0.0
        %387 = vmatprep.subr.mxu0 0.0
        %388 = vmatpush1.msra.mxu0 0.0
        %389 = vmatprep.subr.mxu0 0.0
        %390 = vmatpush1.msra.mxu0 0.0
        %391 = vmatprep.subr.mxu0 0.0
        %392 = vmatpush1.msra.mxu0 0.0
        %393 = vmatprep.subr.mxu0 0.0
        %394 = vmatpush1.msra.mxu0 0.0
        %395 = vmatprep.subr.mxu0 0.0
        %396 = vmatpush1.msra.mxu0 0.0
        %397 = vmatprep.subr.mxu0 0.0
        %398 = vmatpush1.msra.mxu0 0.0
        %399 = vmatprep.subr.mxu0 0.0
        %400 = vmatpush1.msra.mxu0 0.0
        %401 = vmatprep.subr.mxu0 0.0
        %402 = vmatpush1.msra.mxu0 0.0
        %403 = vmatprep.subr.mxu0 0.0
        %404 = vmatpush1.msra.mxu0 0.0
        %405 = vmatprep.subr.mxu0 0.0
        %406 = vmatpush1.msra.mxu0 0.0
        %407 = vmatprep.subr.mxu0 0.0
        %408 = vmatpush1.msra.mxu0 0.0
        %409 = vmatprep.subr.mxu0 0.0
        %410 = vmatpush1.msra.mxu0 0.0
        %411 = vmatprep.subr.mxu0 0.0
        %412 = vmatpush1.msra.mxu0 0.0
        %413 = vmatprep.subr.mxu0 0.0
        %414 = vmatpush1.msra.mxu0 0.0
        %415 = vmatprep.subr.mxu0 0.0
        %416 = vmatpush1.msra.mxu0 0.0
        %417 = vmatprep.subr.mxu0 0.0
        %418 = vmatpush1.msra.mxu0 0.0
        %419 = vmatprep.subr.mxu0 0.0
        %420 = vmatpush1.msra.mxu0 0.0
        %421 = vmatprep.subr.mxu0 0.0
        %422 = vmatpush1.msra.mxu0 0.0
        %423 = vmatprep.subr.mxu0 0.0
        %424 = vmatpush1.msra.mxu0 0.0
        %425 = vmatprep.subr.mxu0 0.0
        %426 = vmatpush1.msra.mxu0 0.0
        %427 = vmatprep.subr.mxu0 0.0
        %428 = vmatpush1.msra.mxu0 0.0
        %429 = vmatprep.subr.mxu0 0.0
        %430 = vmatpush1.msra.mxu0 0.0
        %431 = vmatprep.subr.mxu0 0.0
        %432 = vmatpush1.msra.mxu0 0.0
        %433 = vmatprep.subr.mxu0 0.0
        %434 = vmatpush1.msra.mxu0 0.0
        %435 = vmatprep.subr.mxu0 0.0
        %436 = vmatpush1.msra.mxu0 0.0
        %437 = vmatprep.subr.mxu0 0.0
        %438 = vmatpush1.msra.mxu0 0.0
        %439 = vmatprep.mubr.f32.mxu0 0.0
        %440 = vmatmul.mubr.f32.gmra.mrb[0].mxu0 %v369
        %v441 = vpop.f32.mrb[0].mxu0
        %v442 = vadd.f32 %v365, %v441
        %v443 = vpop.f32.mrb[0].mxu0
        %444 = vdwg.mxu0
        %v445 = vld [vmem:[%s5] sm:$0xff]
        %v446 = vld [vmem:[%s5 + $0x8] sm:$0xff]
        %v447 = vld [vmem:[%s5 + $0x10] sm:$0xff]
        %v448 = vld [vmem:[%s5 + $0x18] sm:$0xff]
        %vm449 = vcmask 130048
        %v451 = vsel %vm449, %v442, 0
        %453 = vmatprep.subr.mxu0 %v446
        %454 = vmatpush1.msra.mxu0 %v445
        %455 = vmatprep.subr.mxu0 %v448
        %456 = vmatpush1.msra.mxu0 %v447
        %457 = vmatprep.subr.mxu0 0.0
        %458 = vmatpush1.msra.mxu0 0.0
        %459 = vmatprep.subr.mxu0 0.0
        %460 = vmatpush1.msra.mxu0 0.0
        %461 = vmatprep.subr.mxu0 0.0
        %462 = vmatpush1.msra.mxu0 0.0
        %463 = vmatprep.subr.mxu0 0.0
        %464 = vmatpush1.msra.mxu0 0.0
        %465 = vmatprep.subr.mxu0 0.0
        %466 = vmatpush1.msra.mxu0 0.0
        %467 = vmatprep.subr.mxu0 0.0
        %468 = vmatpush1.msra.mxu0 0.0
        %469 = vmatprep.subr.mxu0 0.0
        %470 = vmatpush1.msra.mxu0 0.0
        %471 = vmatprep.subr.mxu0 0.0
        %472 = vmatpush1.msra.mxu0 0.0
        %473 = vmatprep.subr.mxu0 0.0
        %474 = vmatpush1.msra.mxu0 0.0
        %475 = vmatprep.subr.mxu0 0.0
        %476 = vmatpush1.msra.mxu0 0.0
        %477 = vmatprep.subr.mxu0 0.0
        %478 = vmatpush1.msra.mxu0 0.0
        %479 = vmatprep.subr.mxu0 0.0
        %480 = vmatpush1.msra.mxu0 0.0
        %481 = vmatprep.subr.mxu0 0.0
        %482 = vmatpush1.msra.mxu0 0.0
        %483 = vmatprep.subr.mxu0 0.0
        %484 = vmatpush1.msra.mxu0 0.0
        %485 = vmatprep.subr.mxu0 0.0
        %486 = vmatpush1.msra.mxu0 0.0
        %487 = vmatprep.subr.mxu0 0.0
        %488 = vmatpush1.msra.mxu0 0.0
        %489 = vmatprep.subr.mxu0 0.0
        %490 = vmatpush1.msra.mxu0 0.0
        %491 = vmatprep.subr.mxu0 0.0
        %492 = vmatpush1.msra.mxu0 0.0
        %493 = vmatprep.subr.mxu0 0.0
        %494 = vmatpush1.msra.mxu0 0.0
        %495 = vmatprep.subr.mxu0 0.0
        %496 = vmatpush1.msra.mxu0 0.0
        %497 = vmatprep.subr.mxu0 0.0
        %498 = vmatpush1.msra.mxu0 0.0
        %499 = vmatprep.subr.mxu0 0.0
        %500 = vmatpush1.msra.mxu0 0.0
        %501 = vmatprep.subr.mxu0 0.0
        %502 = vmatpush1.msra.mxu0 0.0
        %503 = vmatprep.subr.mxu0 0.0
        %504 = vmatpush1.msra.mxu0 0.0
        %505 = vmatprep.subr.mxu0 0.0
        %506 = vmatpush1.msra.mxu0 0.0
        %507 = vmatprep.subr.mxu0 0.0
        %508 = vmatpush1.msra.mxu0 0.0
        %509 = vmatprep.subr.mxu0 0.0
        %510 = vmatpush1.msra.mxu0 0.0
        %511 = vmatprep.subr.mxu0 0.0
        %512 = vmatpush1.msra.mxu0 0.0
        %513 = vmatprep.subr.mxu0 0.0
        %514 = vmatpush1.msra.mxu0 0.0
        %515 = vmatprep.subr.mxu0 0.0
        %516 = vmatpush1.msra.mxu0 0.0
        %517 = vmatprep.mubr.f32.mxu0 0.0
        %518 = vmatmul.mubr.f32.gmra.mrb[0].mxu0 %v451
        %v519 = vpop.f32.mrb[0].mxu0
        %v520 = vadd.f32 0.0, %v519
        %v521 = vpop.f32.mrb[0].mxu0
        %v522 = vadd.f32 0.0, %v521
        %523 = vdwg.mxu0
        %v525 = vsel %vm367, %v254, 0
        %v527 = vsel %vm371, %v253, 0
        %v529 = vsel %vm371, %v288, 0
        %531 = vmatprep.subr.mxu0 %v529
        %532 = vmatpush1.msra.mxu0 %v527
        %533 = vmatprep.subr.mxu0 0.0
        %534 = vmatpush1.msra.mxu0 0.0
        %535 = vmatprep.subr.mxu0 0.0
        %536 = vmatpush1.msra.mxu0 0.0
        %537 = vmatprep.subr.mxu0 0.0
        %538 = vmatpush1.msra.mxu0 0.0
        %539 = vmatprep.subr.mxu0 0.0
        %540 = vmatpush1.msra.mxu0 0.0
        %541 = vmatprep.subr.mxu0 0.0
        %542 = vmatpush1.msra.mxu0 0.0
        %543 = vmatprep.subr.mxu0 0.0
        %544 = vmatpush1.msra.mxu0 0.0
        %545 = vmatprep.subr.mxu0 0.0
        %546 = vmatpush1.msra.mxu0 0.0
        %547 = vmatprep.subr.mxu0 0.0
        %548 = vmatpush1.msra.mxu0 0.0
        %549 = vmatprep.subr.mxu0 0.0
        %550 = vmatpush1.msra.mxu0 0.0
        %551 = vmatprep.subr.mxu0 0.0
        %552 = vmatpush1.msra.mxu0 0.0
        %553 = vmatprep.subr.mxu0 0.0
        %554 = vmatpush1.msra.mxu0 0.0
        %555 = vmatprep.subr.mxu0 0.0
        %556 = vmatpush1.msra.mxu0 0.0
        %557 = vmatprep.subr.mxu0 0.0
        %558 = vmatpush1.msra.mxu0 0.0
        %559 = vmatprep.subr.mxu0 0.0
        %560 = vmatpush1.msra.mxu0 0.0
        %561 = vmatprep.subr.mxu0 0.0
        %562 = vmatpush1.msra.mxu0 0.0
        %563 = vmatprep.subr.mxu0 0.0
        %564 = vmatpush1.msra.mxu0 0.0
        %565 = vmatprep.subr.mxu0 0.0
        %566 = vmatpush1.msra.mxu0 0.0
        %567 = vmatprep.subr.mxu0 0.0
        %568 = vmatpush1.msra.mxu0 0.0
        %569 = vmatprep.subr.mxu0 0.0
        %570 = vmatpush1.msra.mxu0 0.0
        %571 = vmatprep.subr.mxu0 0.0
        %572 = vmatpush1.msra.mxu0 0.0
        %573 = vmatprep.subr.mxu0 0.0
        %574 = vmatpush1.msra.mxu0 0.0
        %575 = vmatprep.subr.mxu0 0.0
        %576 = vmatpush1.msra.mxu0 0.0
        %577 = vmatprep.subr.mxu0 0.0
        %578 = vmatpush1.msra.mxu0 0.0
        %579 = vmatprep.subr.mxu0 0.0
        %580 = vmatpush1.msra.mxu0 0.0
        %581 = vmatprep.subr.mxu0 0.0
        %582 = vmatpush1.msra.mxu0 0.0
        %583 = vmatprep.subr.mxu0 0.0
        %584 = vmatpush1.msra.mxu0 0.0
        %585 = vmatprep.subr.mxu0 0.0
        %586 = vmatpush1.msra.mxu0 0.0
        %587 = vmatprep.subr.mxu0 0.0
        %588 = vmatpush1.msra.mxu0 0.0
        %589 = vmatprep.subr.mxu0 0.0
        %590 = vmatpush1.msra.mxu0 0.0
        %591 = vmatprep.subr.mxu0 0.0
        %592 = vmatpush1.msra.mxu0 0.0
        %593 = vmatprep.subr.mxu0 0.0
        %594 = vmatpush1.msra.mxu0 0.0
        %595 = vmatprep.mubr.f32.mxu0 0.0
        %596 = vmatmul.mubr.f32.gmra.mrb[0].mxu0 %v525
        %v597 = vpop.f32.mrb[0].mxu0
        %v598 = vadd.f32 %v520, %v597
        %v599 = vpop.f32.mrb[0].mxu0
        %v600 = vadd.f32 %v522, %v599
        %601 = vdwg.mxu0
        %602 = vst [vmem:[%s245] sm:$0x3f] %v598
        %603 = vst [vmem:[%s245 + $0x8] sm:$0x3f] %v600
        %s604 = sand.u32 %s159, 1
        %s605 = scalar_lea.sflag [#allocation3], %s604
        %s606 = sand.u32 %s159, 1
        %s607 = smul.addr %s606, 16
        %s608 = scalar_lea.vmem [#allocation2], %s607
        // Predicated region
        $region45: #{tpu_custom_call.1} parent=43 // pred_check
          %p609 = pneg %p169
        $region46: #{tpu_custom_call.1} parent=43 // pred_check_branch
          %611 = sbr.rel (%p609) target = $region48
        $region47: #{tpu_custom_call.1} parent=43 // pred_region
          %s612 = smul.u32 2, %s20
          %s614 = ssub.s32 256, 256
          %615 = vsyncadd %s605, %s614
          %s616 = smul.addr %s612, 128
          %s617 = scalar_lea.hbm %s6, %s616
          %s619 = sshll.u32 %s608, 4
          %s620 = int_to_ptr.vmem [resolvable:$true] %s619
          %622 = dma.vmem_to_hbm [thread:$0]  %s620, 256, %s617, %s605
        $region48: #{tpu_custom_call.1} parent=43 // pred_fallthru
          _
      $region44: #{tpu_custom_call.1} parent=5 // pred_fallthru
        _
      %p623 = scmp.le.s32.totalorder 2, %s15
      // Predicated region
      $region49: #{tpu_custom_call.1} parent=5 // pred_check
        %p624 = pneg %p623
      $region50: #{tpu_custom_call.1} parent=5 // pred_check_branch
        %626 = sbr.rel (%p624) target = $region52
      $region51: #{tpu_custom_call.1} parent=5 // pred_region
        %s627 = ssub.s32 %s15, 2
        // Predicated region
        $region53: #{tpu_custom_call.1} parent=51 // pred_check
          %p628 = pneg %p175
        $region54: #{tpu_custom_call.1} parent=51 // pred_check_branch
          %630 = sbr.rel (%p628) target = $region56
        $region55: #{tpu_custom_call.1} parent=51 // pred_region
          %s631 = sand.u32 %s160, 1
          %s632 = scalar_lea.sflag [#allocation3], %s631
          %s633 = sand.u32 %s160, 1
          %s634 = smul.addr %s633, 16
          %s635 = scalar_lea.vmem [#allocation2], %s634
          %636 = dma.done %s632, 256
        $region56: #{tpu_custom_call.1} parent=51 // pred_fallthru
          _
      $region52: #{tpu_custom_call.1} parent=5 // pred_fallthru
        _
    $region6: #{tpu_custom_call.1} parent=1 // loop_footer
      %s19 = sadd.s32 1, %s15
    $region7: #{tpu_custom_call.1} parent=1 // loop_footer_branch
      %14 = sbr.rel target = $region3
    $region8: #{tpu_custom_call.1} parent=1 // loop_exit
      _
    %637 = vsyncpa [#allocation3], 1
    %s638 = scalar_lea.sflag [#allocation3], 1
    %639 = vsyncpa %s638, 1

</llo_original>
